<compile_context>
chip_gen: v6e
topology: v6e:2x2x1
jax: 0.10.0
libtpu: 0.0.40
codegen_flags: <defaults>
</compile_context>

<pallas_src>
import jax
import jax.numpy as jnp
from jax.experimental import pallas as pl
from jax.experimental.pallas import tpu as pltpu

OPENAI_DATASET_MEAN = (0.48145466, 0.4578275, 0.40821073)
OPENAI_DATASET_STD = (0.26862954, 0.26130258, 0.27577711)


def _round_up(n, m):
    return ((n + m - 1) // m) * m


# ----------------------------- Pallas kernel --------------------------------


def _encode_pair_kernel(xp_ref, gp_ref, mean_ref, invstd_ref, w_ref, b_ref,
                        pos_ref, gamma_ref, beta_ref, wproj_ref,
                        xfeat_ref, gfeat_ref):
    """Fused encoder for one batch tile of BOTH x and gt.

    xp_ref / gp_ref : (Bt, T, P)  raw pixel patches for x / gt (natural P)
    mean_ref        : (1, P)      per-patch-element channel mean
    invstd_ref      : (1, P)      per-patch-element 1/std
    w_ref           : (P, D)      patch-embedding weight (bf16)
    b_ref           : (1, D)      patch-embedding bias   (f32)
    pos_ref         : (T, D)      positional embedding   (f32)
    gamma_ref       : (1, D)      LayerNorm scale
    beta_ref        : (1, D)      LayerNorm shift
    wproj_ref       : (D, Ep)     final projection (bf16, zero-padded cols)
    xfeat_ref       : (Bt, Ep)    output features for x (lane-dense slab)
    gfeat_ref       : (Bt, Ep)    output features for gt
    """
    bt, t, p = xp_ref.shape
    d = pos_ref.shape[1]
    ep = wproj_ref.shape[1]

    def encode(p_ref, out_ref):
        x = p_ref[...].reshape(bt * t, p)                          # f32
        # Channel normalize (Normalize(mean, std)) — f32 VPU.
        xn = (x - mean_ref[...]) * invstd_ref[...]
        # Patch embedding: ONE (Bt*T, P) x (P, D) bf16 MXU matmul, f32 acc.
        tok = jnp.dot(xn.astype(jnp.bfloat16), w_ref[...],
                      preferred_element_type=jnp.float32)          # (Bt*T, D)
        tok = tok + b_ref[...]
        tok = tok.reshape(bt, t, d) + pos_ref[...]                 # (Bt, T, D)
        # LayerNorm over the feature axis (lane reduce, f32).
        mu = jnp.mean(tok, axis=-1, keepdims=True)
        var = jnp.mean(jnp.square(tok - mu), axis=-1, keepdims=True)
        tokn = (tok - mu) * jax.lax.rsqrt(var + 1e-5)
        tokn = tokn * gamma_ref[...] + beta_ref[...]
        # Project-then-pool: one big bf16 MXU matmul (M = Bt*T), then a cheap
        # cross-sublane token mean (XLU has slack here).
        proj = jnp.dot(tokn.reshape(bt * t, d).astype(jnp.bfloat16),
                       wproj_ref[...], preferred_element_type=jnp.float32)
        out_ref[...] = jnp.mean(proj.reshape(bt, t, ep), axis=1)

    encode(xp_ref, xfeat_ref)
    encode(gp_ref, gfeat_ref)


# ------------------------------- JAX glue ------------------------------------


def _interpolate_nearest(x, out_hw):
    """F.interpolate(x, size) with default mode='nearest' on NCHW input."""
    _, _, h, w = x.shape
    oh, ow = out_hw
    rows = (jnp.arange(oh) * h // oh).astype(jnp.int32)
    cols = (jnp.arange(ow) * w // ow).astype(jnp.int32)
    return x[:, :, rows, :][:, :, :, cols]


def _patchify(x, ps):
    """NCHW -> [B, num_patches, C*ps*ps], patch element order (c, i, j)."""
    b, c, h, w = x.shape
    nh, nw = h // ps, w // ps
    x = x.reshape(b, c, nh, ps, nw, ps)
    x = x.transpose(0, 2, 4, 1, 3, 5)            # [B, nh, nw, C, ps, ps]
    return x.reshape(b, nh * nw, c * ps * ps)


class CLIPScorePallas:
    """Synthetic stand-in for CLIPSCORE: interpolate -> normalize ->
    encode_image -> mean L1 between features -> * loss_weight."""

    def __init__(self, img_size=(32, 32), patch=8, width=128, embed=32,
                 loss_weight=2.0, seed=0, max_batch_tile=16):
        self.img_size = img_size
        self.patch = patch
        self.width = width                  # D (128 -> full lane occupancy)
        self.embed = embed                  # E
        self.loss_weight = float(loss_weight)
        # Default Bt=16 with T=16 gives M = Bt*T = 256 per MXU matmul
        # (fills the v6e/v7x 2x256^2 MXU; also fine on v5e's 4x128^2).
        self.max_batch_tile = max_batch_tile

        c = 3
        ps = patch
        self.n_patches = (img_size[0] // ps) * (img_size[1] // ps)   # T
        self.p_dim = c * ps * ps                                     # P (natural)
        self.e_pad = _round_up(self.embed, 128)                      # padded E

        # deterministic synthetic parameters (no checkpoint load)
        keys = jax.random.split(jax.random.PRNGKey(seed), 4)
        w = (jax.random.normal(keys[0], (self.p_dim, width), jnp.float32)
             * (1.0 / jnp.sqrt(self.p_dim)))
        self.w_patch = w.astype(jnp.bfloat16)            # bf16 weights on host
        self.b_patch = jnp.zeros((1, width), jnp.float32)
        self.pos_emb = (jax.random.normal(keys[1], (self.n_patches, width),
                                          jnp.float32) * 0.02)
        self.gamma = jnp.ones((1, width), jnp.float32)
        self.beta = jnp.zeros((1, width), jnp.float32)
        wp = (jax.random.normal(keys[2], (width, embed), jnp.float32)
              * (1.0 / jnp.sqrt(width)))
        w_proj = jnp.zeros((width, self.e_pad), jnp.float32)
        self.w_proj = w_proj.at[:, :embed].set(wp).astype(jnp.bfloat16)

        mean = jnp.asarray(OPENAI_DATASET_MEAN, jnp.float32)
        std = jnp.asarray(OPENAI_DATASET_STD, jnp.float32)
        # per-patch-element (c, i, j) ordering, natural P (no lane pad in HBM)
        self.mean_vec = jnp.repeat(mean, ps * ps).reshape(1, self.p_dim)
        self.invstd_vec = jnp.repeat(1.0 / std, ps * ps).reshape(1, self.p_dim)

        self._forward = jax.jit(self._forward_impl)

    # --- preprocessing -------------------------------------------------------

    def _preprocess(self, x):
        """NCHW float32 -> (B, T, P) patches (natural P, no pad copy)."""
        x = _interpolate_nearest(x, self.img_size)
        return _patchify(x, self.patch)

    # --- forward -------------------------------------------------------------

    def _forward_impl(self, x, gt):
        xp = self._preprocess(x)                         # (B, T, P)
        gp = self._preprocess(gt)
        b_total, t, p = xp.shape
        d, e_pad = self.width, self.e_pad

        # Batch tiling: fill the MXU M dimension (Bt*T). Single grid step for
        # small batches; only split when each block keeps a full (8-aligned)
        # batch tile.
        max_bt = self.max_batch_tile
        if b_total <= max_bt:
            bt, n_blocks, b_pad = b_total, 1, b_total
        else:
            bt = max(8, (max_bt // 8) * 8)
            n_blocks = pl.cdiv(b_total, bt)
            b_pad = n_blocks * bt
            if b_pad != b_total:
                pad = ((0, b_pad - b_total), (0, 0), (0, 0))
                xp = jnp.pad(xp, pad)
                gp = jnp.pad(gp, pad)

        const = lambda shape: pl.BlockSpec(shape, lambda i: (0,) * len(shape))
        xfeat, gfeat = pl.pallas_call(
            _encode_pair_kernel,
            out_shape=(jax.ShapeDtypeStruct((b_pad, e_pad), jnp.float32),
                       jax.ShapeDtypeStruct((b_pad, e_pad), jnp.float32)),
            grid_spec=pltpu.PrefetchScalarGridSpec(
                num_scalar_prefetch=0,
                grid=(n_blocks,),
                in_specs=[
                    pl.BlockSpec((bt, t, p), lambda i: (i, 0, 0)),   # x patches
                    pl.BlockSpec((bt, t, p), lambda i: (i, 0, 0)),   # gt patches
                    const((1, p)),            # mean
                    const((1, p)),            # 1/std
                    const((p, d)),            # patch-embed weight (bf16)
                    const((1, d)),            # patch-embed bias
                    const((t, d)),            # positional embedding
                    const((1, d)),            # ln gamma
                    const((1, d)),            # ln beta
                    const((d, e_pad)),        # projection (bf16)
                ],
                out_specs=[
                    pl.BlockSpec((bt, e_pad), lambda i: (i, 0)),
                    pl.BlockSpec((bt, e_pad), lambda i: (i, 0)),
                ],
            ),
            compiler_params=pltpu.CompilerParams(
                dimension_semantics=("parallel",)),
        )(xp, gp, self.mean_vec, self.invstd_vec, self.w_patch, self.b_patch,
          self.pos_emb, self.gamma, self.beta, self.w_proj)

        x_feats = xfeat[:b_total, :self.embed]
        gt_feats = gfeat[:b_total, :self.embed]
        # F.l1_loss(reduction='mean') * loss_weight: tiny B*E reduction in
        # plain JAX (a dedicated pallas_call would be pure launch overhead).
        return jnp.mean(jnp.abs(x_feats - gt_feats)) * self.loss_weight

    def __call__(self, x, gt):
        return self._forward(x, gt)


# Pure-JAX reference (f32 everywhere, same bf16-quantized weight values) used
# as a correctness guard.
def _reference_score(model, x, gt):
    w_patch = model.w_patch.astype(jnp.float32)
    w_proj = model.w_proj.astype(jnp.float32)[:, :model.embed]

    def enc(img):
        img = _interpolate_nearest(img, model.img_size)
        ptc = _patchify(img, model.patch)                      # (B, T, P)
        xn = (ptc - model.mean_vec) * model.invstd_vec
        tok = jnp.einsum('btp,pd->btd', xn, w_patch)
        tok = tok + model.b_patch + model.pos_emb
        mu = tok.mean(-1, keepdims=True)
        var = ((tok - mu) ** 2).mean(-1, keepdims=True)
        tokn = (tok - mu) * jax.lax.rsqrt(var + 1e-5)
        tokn = tokn * model.gamma + model.beta
        pooled = tokn.mean(axis=1)                             # pool==project order
        return pooled @ w_proj

    return jnp.mean(jnp.abs(enc(x) - enc(gt))) * model.loss_weight


if __name__ == "__main__":
    key = jax.random.PRNGKey(0)
    kx, kg = jax.random.split(key)
    # small shapes consistent with the module: NCHW, 3 channels (RGB normalize)
    x = jax.random.uniform(kx, (2, 3, 16, 16), jnp.float32)
    gt = jax.random.uniform(kg, (2, 3, 16, 16), jnp.float32)

    model = CLIPScorePallas(img_size=(32, 32), patch=8, width=128, embed=32,
                            loss_weight=2.0, seed=0)
    score = model(x, gt)
    jax.block_until_ready(score)
    assert score.shape == () and jnp.isfinite(score)

    ref = _reference_score(model, x, gt)
    # bf16 is used only for matmul operands (f32 accumulate), so the score
    # matches the f32 reference well within the loose tolerance.
    assert jnp.allclose(score, ref, rtol=0.1, atol=1e-2), (score, ref)
    print("KERNEL_OK")
</pallas_src>

<mosaic_0001>
module attributes {stable_mosaic.version = 11 : i64} {
  func.func @_encode_pair_kernel(%arg0: i32, %arg1: memref<2x16x192xf32, #tpu.memory_space<vmem>>, %arg2: memref<2x16x192xf32, #tpu.memory_space<vmem>>, %arg3: memref<1x192xf32, #tpu.memory_space<vmem>>, %arg4: memref<1x192xf32, #tpu.memory_space<vmem>>, %arg5: memref<192x128xbf16, #tpu.memory_space<vmem>>, %arg6: memref<1x128xf32, #tpu.memory_space<vmem>>, %arg7: memref<16x128xf32, #tpu.memory_space<vmem>>, %arg8: memref<1x128xf32, #tpu.memory_space<vmem>>, %arg9: memref<1x128xf32, #tpu.memory_space<vmem>>, %arg10: memref<128x128xbf16, #tpu.memory_space<vmem>>, %arg11: memref<2x128xf32, #tpu.memory_space<vmem>>, %arg12: memref<2x128xf32, #tpu.memory_space<vmem>>) attributes {dimension_semantics = [#tpu.dimension_semantics<parallel>], iteration_bounds = array<i64: 1>, scalar_prefetch = 0 : i64, scratch_operands = 0 : i64, tpu.core_type = #tpu.core_type<tc>, window_params = [{transform_indices = @transform_0, window_bounds = array<i64: 2, 16, 192>}, {transform_indices = @transform_1, window_bounds = array<i64: 2, 16, 192>}, {pipeline_mode = #tpu.pipeline_mode<synchronous>, transform_indices = @transform_2, window_bounds = array<i64: 1, 192>}, {pipeline_mode = #tpu.pipeline_mode<synchronous>, transform_indices = @transform_3, window_bounds = array<i64: 1, 192>}, {pipeline_mode = #tpu.pipeline_mode<synchronous>, transform_indices = @transform_4, window_bounds = array<i64: 192, 128>}, {pipeline_mode = #tpu.pipeline_mode<synchronous>, transform_indices = @transform_5, window_bounds = array<i64: 1, 128>}, {pipeline_mode = #tpu.pipeline_mode<synchronous>, transform_indices = @transform_6, window_bounds = array<i64: 16, 128>}, {pipeline_mode = #tpu.pipeline_mode<synchronous>, transform_indices = @transform_7, window_bounds = array<i64: 1, 128>}, {pipeline_mode = #tpu.pipeline_mode<synchronous>, transform_indices = @transform_8, window_bounds = array<i64: 1, 128>}, {pipeline_mode = #tpu.pipeline_mode<synchronous>, transform_indices = @transform_9, window_bounds = array<i64: 128, 128>}, {transform_indices = @transform_10, window_bounds = array<i64: 2, 128>}, {transform_indices = @transform_11, window_bounds = array<i64: 2, 128>}]} {
    %c0 = arith.constant 0 : index
    %c0_0 = arith.constant 0 : index
    %c0_1 = arith.constant 0 : index
    %0 = vector.load %arg1[%c0, %c0_0, %c0_1] : memref<2x16x192xf32, #tpu.memory_space<vmem>>, vector<2x16x192xf32>
    %1 = vector.shape_cast %0 : vector<2x16x192xf32> to vector<32x192xf32>
    %c0_2 = arith.constant 0 : index
    %c0_3 = arith.constant 0 : index
    %2 = vector.load %arg3[%c0_2, %c0_3] : memref<1x192xf32, #tpu.memory_space<vmem>>, vector<1x192xf32>
    %3 = vector.broadcast %2 : vector<1x192xf32> to vector<32x192xf32>
    %4 = arith.subf %1, %3 : vector<32x192xf32>
    %c0_4 = arith.constant 0 : index
    %c0_5 = arith.constant 0 : index
    %5 = vector.load %arg4[%c0_4, %c0_5] : memref<1x192xf32, #tpu.memory_space<vmem>>, vector<1x192xf32>
    %6 = vector.broadcast %5 : vector<1x192xf32> to vector<32x192xf32>
    %7 = arith.mulf %4, %6 : vector<32x192xf32>
    %8 = arith.truncf %7 : vector<32x192xf32> to vector<32x192xbf16>
    %c0_6 = arith.constant 0 : index
    %c0_7 = arith.constant 0 : index
    %9 = vector.load %arg5[%c0_6, %c0_7] : memref<192x128xbf16, #tpu.memory_space<vmem>>, vector<192x128xbf16>
    %cst = arith.constant dense<0.000000e+00> : vector<32x128xf32>
    %10 = tpu.matmul %8, %9, %cst {dimension_numbers = #tpu.dot_dimension_numbers<[1], [0], [0], [1], [0, 0, 1, 1], [], []>} : vector<32x192xbf16>, vector<192x128xbf16>, vector<32x128xf32> -> vector<32x128xf32>
    %c0_8 = arith.constant 0 : index
    %c0_9 = arith.constant 0 : index
    %11 = vector.load %arg6[%c0_8, %c0_9] : memref<1x128xf32, #tpu.memory_space<vmem>>, vector<1x128xf32>
    %12 = vector.broadcast %11 : vector<1x128xf32> to vector<32x128xf32>
    %13 = arith.addf %10, %12 : vector<32x128xf32>
    %14 = vector.shape_cast %13 : vector<32x128xf32> to vector<2x16x128xf32>
    %c0_10 = arith.constant 0 : index
    %c0_11 = arith.constant 0 : index
    %15 = vector.load %arg7[%c0_10, %c0_11] : memref<16x128xf32, #tpu.memory_space<vmem>>, vector<16x128xf32>
    %16 = vector.shape_cast %15 : vector<16x128xf32> to vector<1x16x128xf32>
    %17 = vector.broadcast %16 : vector<1x16x128xf32> to vector<2x16x128xf32>
    %18 = arith.addf %14, %17 : vector<2x16x128xf32>
    %cst_12 = arith.constant dense<0.000000e+00> : vector<2x16xf32>
    %19 = vector.multi_reduction <add>, %18, %cst_12 [2] : vector<2x16x128xf32> to vector<2x16xf32>
    %20 = vector.shape_cast %19 : vector<2x16xf32> to vector<2x16x1xf32>
    %cst_13 = arith.constant 1.280000e+02 : f32
    %21 = vector.broadcast %cst_13 : f32 to vector<2x16x1xf32>
    %22 = arith.divf %20, %21 : vector<2x16x1xf32>
    %23 = vector.broadcast %22 : vector<2x16x1xf32> to vector<2x16x128xf32>
    %24 = arith.subf %18, %23 : vector<2x16x128xf32>
    %25 = arith.mulf %24, %24 : vector<2x16x128xf32>
    %cst_14 = arith.constant dense<0.000000e+00> : vector<2x16xf32>
    %26 = vector.multi_reduction <add>, %25, %cst_14 [2] : vector<2x16x128xf32> to vector<2x16xf32>
    %27 = vector.shape_cast %26 : vector<2x16xf32> to vector<2x16x1xf32>
    %cst_15 = arith.constant 1.280000e+02 : f32
    %28 = vector.broadcast %cst_15 : f32 to vector<2x16x1xf32>
    %29 = arith.divf %27, %28 : vector<2x16x1xf32>
    %30 = vector.broadcast %22 : vector<2x16x1xf32> to vector<2x16x128xf32>
    %31 = arith.subf %18, %30 : vector<2x16x128xf32>
    %cst_16 = arith.constant 9.99999974E-6 : f32
    %32 = vector.broadcast %cst_16 : f32 to vector<2x16x1xf32>
    %33 = arith.addf %29, %32 : vector<2x16x1xf32>
    %34 = math.rsqrt %33 : vector<2x16x1xf32>
    %35 = vector.broadcast %34 : vector<2x16x1xf32> to vector<2x16x128xf32>
    %36 = arith.mulf %31, %35 : vector<2x16x128xf32>
    %c0_17 = arith.constant 0 : index
    %c0_18 = arith.constant 0 : index
    %37 = vector.load %arg8[%c0_17, %c0_18] : memref<1x128xf32, #tpu.memory_space<vmem>>, vector<1x128xf32>
    %38 = vector.shape_cast %37 : vector<1x128xf32> to vector<1x1x128xf32>
    %39 = vector.broadcast %38 : vector<1x1x128xf32> to vector<2x16x128xf32>
    %40 = arith.mulf %36, %39 : vector<2x16x128xf32>
    %c0_19 = arith.constant 0 : index
    %c0_20 = arith.constant 0 : index
    %41 = vector.load %arg9[%c0_19, %c0_20] : memref<1x128xf32, #tpu.memory_space<vmem>>, vector<1x128xf32>
    %42 = vector.shape_cast %41 : vector<1x128xf32> to vector<1x1x128xf32>
    %43 = vector.broadcast %42 : vector<1x1x128xf32> to vector<2x16x128xf32>
    %44 = arith.addf %40, %43 : vector<2x16x128xf32>
    %45 = vector.shape_cast %44 : vector<2x16x128xf32> to vector<32x128xf32>
    %46 = arith.truncf %45 : vector<32x128xf32> to vector<32x128xbf16>
    %c0_21 = arith.constant 0 : index
    %c0_22 = arith.constant 0 : index
    %47 = vector.load %arg10[%c0_21, %c0_22] : memref<128x128xbf16, #tpu.memory_space<vmem>>, vector<128x128xbf16>
    %cst_23 = arith.constant dense<0.000000e+00> : vector<32x128xf32>
    %48 = tpu.matmul %46, %47, %cst_23 {dimension_numbers = #tpu.dot_dimension_numbers<[1], [0], [0], [1], [0, 0, 1, 1], [], []>} : vector<32x128xbf16>, vector<128x128xbf16>, vector<32x128xf32> -> vector<32x128xf32>
    %49 = vector.shape_cast %48 : vector<32x128xf32> to vector<2x16x128xf32>
    %cst_24 = arith.constant dense<0.000000e+00> : vector<2x128xf32>
    %50 = vector.multi_reduction <add>, %49, %cst_24 [1] : vector<2x16x128xf32> to vector<2x128xf32>
    %cst_25 = arith.constant 1.600000e+01 : f32
    %51 = vector.broadcast %cst_25 : f32 to vector<2x128xf32>
    %52 = arith.divf %50, %51 : vector<2x128xf32>
    %c0_26 = arith.constant 0 : index
    %c0_27 = arith.constant 0 : index
    %53 = vector.load %arg11[%c0_26, %c0_27] : memref<2x128xf32, #tpu.memory_space<vmem>>, vector<2x128xf32>
    tpu.vector_store %arg11[%c0_26, %c0_27], %52 {strides = array<i32>} : memref<2x128xf32, #tpu.memory_space<vmem>>, vector<2x128xf32>,
    %c0_28 = arith.constant 0 : index
    %c0_29 = arith.constant 0 : index
    %c0_30 = arith.constant 0 : index
    %54 = vector.load %arg2[%c0_28, %c0_29, %c0_30] : memref<2x16x192xf32, #tpu.memory_space<vmem>>, vector<2x16x192xf32>
    %55 = vector.shape_cast %54 : vector<2x16x192xf32> to vector<32x192xf32>
    %c0_31 = arith.constant 0 : index
    %c0_32 = arith.constant 0 : index
    %56 = vector.load %arg3[%c0_31, %c0_32] : memref<1x192xf32, #tpu.memory_space<vmem>>, vector<1x192xf32>
    %57 = vector.broadcast %56 : vector<1x192xf32> to vector<32x192xf32>
    %58 = arith.subf %55, %57 : vector<32x192xf32>
    %c0_33 = arith.constant 0 : index
    %c0_34 = arith.constant 0 : index
    %59 = vector.load %arg4[%c0_33, %c0_34] : memref<1x192xf32, #tpu.memory_space<vmem>>, vector<1x192xf32>
    %60 = vector.broadcast %59 : vector<1x192xf32> to vector<32x192xf32>
    %61 = arith.mulf %58, %60 : vector<32x192xf32>
    %62 = arith.truncf %61 : vector<32x192xf32> to vector<32x192xbf16>
    %c0_35 = arith.constant 0 : index
    %c0_36 = arith.constant 0 : index
    %63 = vector.load %arg5[%c0_35, %c0_36] : memref<192x128xbf16, #tpu.memory_space<vmem>>, vector<192x128xbf16>
    %cst_37 = arith.constant dense<0.000000e+00> : vector<32x128xf32>
    %64 = tpu.matmul %62, %63, %cst_37 {dimension_numbers = #tpu.dot_dimension_numbers<[1], [0], [0], [1], [0, 0, 1, 1], [], []>} : vector<32x192xbf16>, vector<192x128xbf16>, vector<32x128xf32> -> vector<32x128xf32>
    %c0_38 = arith.constant 0 : index
    %c0_39 = arith.constant 0 : index
    %65 = vector.load %arg6[%c0_38, %c0_39] : memref<1x128xf32, #tpu.memory_space<vmem>>, vector<1x128xf32>
    %66 = vector.broadcast %65 : vector<1x128xf32> to vector<32x128xf32>
    %67 = arith.addf %64, %66 : vector<32x128xf32>
    %68 = vector.shape_cast %67 : vector<32x128xf32> to vector<2x16x128xf32>
    %c0_40 = arith.constant 0 : index
    %c0_41 = arith.constant 0 : index
    %69 = vector.load %arg7[%c0_40, %c0_41] : memref<16x128xf32, #tpu.memory_space<vmem>>, vector<16x128xf32>
    %70 = vector.shape_cast %69 : vector<16x128xf32> to vector<1x16x128xf32>
    %71 = vector.broadcast %70 : vector<1x16x128xf32> to vector<2x16x128xf32>
    %72 = arith.addf %68, %71 : vector<2x16x128xf32>
    %cst_42 = arith.constant dense<0.000000e+00> : vector<2x16xf32>
    %73 = vector.multi_reduction <add>, %72, %cst_42 [2] : vector<2x16x128xf32> to vector<2x16xf32>
    %74 = vector.shape_cast %73 : vector<2x16xf32> to vector<2x16x1xf32>
    %cst_43 = arith.constant 1.280000e+02 : f32
    %75 = vector.broadcast %cst_43 : f32 to vector<2x16x1xf32>
    %76 = arith.divf %74, %75 : vector<2x16x1xf32>
    %77 = vector.broadcast %76 : vector<2x16x1xf32> to vector<2x16x128xf32>
    %78 = arith.subf %72, %77 : vector<2x16x128xf32>
    %79 = arith.mulf %78, %78 : vector<2x16x128xf32>
    %cst_44 = arith.constant dense<0.000000e+00> : vector<2x16xf32>
    %80 = vector.multi_reduction <add>, %79, %cst_44 [2] : vector<2x16x128xf32> to vector<2x16xf32>
    %81 = vector.shape_cast %80 : vector<2x16xf32> to vector<2x16x1xf32>
    %cst_45 = arith.constant 1.280000e+02 : f32
    %82 = vector.broadcast %cst_45 : f32 to vector<2x16x1xf32>
    %83 = arith.divf %81, %82 : vector<2x16x1xf32>
    %84 = vector.broadcast %76 : vector<2x16x1xf32> to vector<2x16x128xf32>
    %85 = arith.subf %72, %84 : vector<2x16x128xf32>
    %cst_46 = arith.constant 9.99999974E-6 : f32
    %86 = vector.broadcast %cst_46 : f32 to vector<2x16x1xf32>
    %87 = arith.addf %83, %86 : vector<2x16x1xf32>
    %88 = math.rsqrt %87 : vector<2x16x1xf32>
    %89 = vector.broadcast %88 : vector<2x16x1xf32> to vector<2x16x128xf32>
    %90 = arith.mulf %85, %89 : vector<2x16x128xf32>
    %c0_47 = arith.constant 0 : index
    %c0_48 = arith.constant 0 : index
    %91 = vector.load %arg8[%c0_47, %c0_48] : memref<1x128xf32, #tpu.memory_space<vmem>>, vector<1x128xf32>
    %92 = vector.shape_cast %91 : vector<1x128xf32> to vector<1x1x128xf32>
    %93 = vector.broadcast %92 : vector<1x1x128xf32> to vector<2x16x128xf32>
    %94 = arith.mulf %90, %93 : vector<2x16x128xf32>
    %c0_49 = arith.constant 0 : index
    %c0_50 = arith.constant 0 : index
    %95 = vector.load %arg9[%c0_49, %c0_50] : memref<1x128xf32, #tpu.memory_space<vmem>>, vector<1x128xf32>
    %96 = vector.shape_cast %95 : vector<1x128xf32> to vector<1x1x128xf32>
    %97 = vector.broadcast %96 : vector<1x1x128xf32> to vector<2x16x128xf32>
    %98 = arith.addf %94, %97 : vector<2x16x128xf32>
    %99 = vector.shape_cast %98 : vector<2x16x128xf32> to vector<32x128xf32>
    %100 = arith.truncf %99 : vector<32x128xf32> to vector<32x128xbf16>
    %c0_51 = arith.constant 0 : index
    %c0_52 = arith.constant 0 : index
    %101 = vector.load %arg10[%c0_51, %c0_52] : memref<128x128xbf16, #tpu.memory_space<vmem>>, vector<128x128xbf16>
    %cst_53 = arith.constant dense<0.000000e+00> : vector<32x128xf32>
    %102 = tpu.matmul %100, %101, %cst_53 {dimension_numbers = #tpu.dot_dimension_numbers<[1], [0], [0], [1], [0, 0, 1, 1], [], []>} : vector<32x128xbf16>, vector<128x128xbf16>, vector<32x128xf32> -> vector<32x128xf32>
    %103 = vector.shape_cast %102 : vector<32x128xf32> to vector<2x16x128xf32>
    %cst_54 = arith.constant dense<0.000000e+00> : vector<2x128xf32>
    %104 = vector.multi_reduction <add>, %103, %cst_54 [1] : vector<2x16x128xf32> to vector<2x128xf32>
    %cst_55 = arith.constant 1.600000e+01 : f32
    %105 = vector.broadcast %cst_55 : f32 to vector<2x128xf32>
    %106 = arith.divf %104, %105 : vector<2x128xf32>
    %c0_56 = arith.constant 0 : index
    %c0_57 = arith.constant 0 : index
    %107 = vector.load %arg12[%c0_56, %c0_57] : memref<2x128xf32, #tpu.memory_space<vmem>>, vector<2x128xf32>
    tpu.vector_store %arg12[%c0_56, %c0_57], %106 {strides = array<i32>} : memref<2x128xf32, #tpu.memory_space<vmem>>, vector<2x128xf32>,
    return
  }
  func.func @transform_0(%arg0: i32) -> (i32, i32, i32) {
    %c0_i32 = arith.constant 0 : i32
    %c0_i32_0 = arith.constant 0 : i32
    %c0_i32_1 = arith.constant 0 : i32
    return %arg0, %c0_i32, %c0_i32_0 : i32, i32, i32
  }
  func.func @transform_1(%arg0: i32) -> (i32, i32, i32) {
    %c0_i32 = arith.constant 0 : i32
    %c0_i32_0 = arith.constant 0 : i32
    %c0_i32_1 = arith.constant 0 : i32
    return %arg0, %c0_i32, %c0_i32_0 : i32, i32, i32
  }
  func.func @transform_2(%arg0: i32) -> (i32, i32) {
    %c0_i32 = arith.constant 0 : i32
    %c0_i32_0 = arith.constant 0 : i32
    %c0_i32_1 = arith.constant 0 : i32
    return %c0_i32, %c0_i32_0 : i32, i32
  }
  func.func @transform_3(%arg0: i32) -> (i32, i32) {
    %c0_i32 = arith.constant 0 : i32
    %c0_i32_0 = arith.constant 0 : i32
    %c0_i32_1 = arith.constant 0 : i32
    return %c0_i32, %c0_i32_0 : i32, i32
  }
  func.func @transform_4(%arg0: i32) -> (i32, i32) {
    %c0_i32 = arith.constant 0 : i32
    %c0_i32_0 = arith.constant 0 : i32
    %c0_i32_1 = arith.constant 0 : i32
    return %c0_i32, %c0_i32_0 : i32, i32
  }
  func.func @transform_5(%arg0: i32) -> (i32, i32) {
    %c0_i32 = arith.constant 0 : i32
    %c0_i32_0 = arith.constant 0 : i32
    %c0_i32_1 = arith.constant 0 : i32
    return %c0_i32, %c0_i32_0 : i32, i32
  }
  func.func @transform_6(%arg0: i32) -> (i32, i32) {
    %c0_i32 = arith.constant 0 : i32
    %c0_i32_0 = arith.constant 0 : i32
    %c0_i32_1 = arith.constant 0 : i32
    return %c0_i32, %c0_i32_0 : i32, i32
  }
  func.func @transform_7(%arg0: i32) -> (i32, i32) {
    %c0_i32 = arith.constant 0 : i32
    %c0_i32_0 = arith.constant 0 : i32
    %c0_i32_1 = arith.constant 0 : i32
    return %c0_i32, %c0_i32_0 : i32, i32
  }
  func.func @transform_8(%arg0: i32) -> (i32, i32) {
    %c0_i32 = arith.constant 0 : i32
    %c0_i32_0 = arith.constant 0 : i32
    %c0_i32_1 = arith.constant 0 : i32
    return %c0_i32, %c0_i32_0 : i32, i32
  }
  func.func @transform_9(%arg0: i32) -> (i32, i32) {
    %c0_i32 = arith.constant 0 : i32
    %c0_i32_0 = arith.constant 0 : i32
    %c0_i32_1 = arith.constant 0 : i32
    return %c0_i32, %c0_i32_0 : i32, i32
  }
  func.func @transform_10(%arg0: i32) -> (i32, i32) {
    %c0_i32 = arith.constant 0 : i32
    %c0_i32_0 = arith.constant 0 : i32
    return %arg0, %c0_i32 : i32, i32
  }
  func.func @transform_11(%arg0: i32) -> (i32, i32) {
    %c0_i32 = arith.constant 0 : i32
    %c0_i32_0 = arith.constant 0 : i32
    return %arg0, %c0_i32 : i32, i32
  }
}

</mosaic_0001>

<llo_original>
// kernel: _forward_impl.1
$region0: #{_forward_impl.1}
  #allocation0 [shape = 'u32[]', space=smem, size = 0x4, offset = 0x4, fixed_abs, tag = 'smem constant byte address 0x4 - core index']
  #allocation1 [shape = 'u32[144,128]{1,0:T(1,128)}', space=vmem, size = 0x12000, scoped, tag = 'internal scratch']
  %s0 = inlined_call_operand.vmem [shape: f32[2,16,192], index: 0, kind: input, shape index: {}]
  %s1 = inlined_call_operand.vmem [shape: f32[2,16,192], index: 1, kind: input, shape index: {}]
  %s2 = inlined_call_operand.vmem [shape: f32[1,192], index: 2, kind: input, shape index: {}]
  %s3 = inlined_call_operand.vmem [shape: f32[1,192], index: 3, kind: input, shape index: {}]
  %s4 = inlined_call_operand.vmem [shape: bf16[192,128], index: 4, kind: input, shape index: {}]
  %s5 = inlined_call_operand.vmem [shape: f32[1,128], index: 5, kind: input, shape index: {}, may-alias: {5,8}]
  %s6 = inlined_call_operand.vmem [shape: f32[16,128], index: 6, kind: input, shape index: {}]
  %s7 = inlined_call_operand.vmem [shape: f32[1,128], index: 7, kind: input, shape index: {}]
  %s8 = inlined_call_operand.vmem [shape: f32[1,128], index: 8, kind: input, shape index: {}, may-alias: {5,8}]
  %s9 = inlined_call_operand.vmem [shape: bf16[128,128], index: 9, kind: input, shape index: {}]
  %s10 = inlined_call_operand.vmem [shape: f32[2,128], index: 10, kind: output, shape index: {0}]
  %s11 = inlined_call_operand.vmem [shape: f32[2,128], index: 11, kind: output, shape index: {1}]
  %12 = xla_tuple %s10, %s11
  %s13 = sld [smem:[#allocation0]]
  $region58: #{_forward_impl.1} parent=0
    _
  %s15 = ssub.s32 1, %s13
  %s16 = scalar_select 0, %s15, %s13
  // Predicated region
  $region2: #{_forward_impl.1} parent=0 // pred_check
    _
  $region3: #{_forward_impl.1} parent=0 // pred_check_branch
    %18 = sbr.rel (0) target = $region5
  $region4: #{_forward_impl.1} parent=0 // pred_region
    _
  $region5: #{_forward_impl.1} parent=0 // pred_fallthru
    _
  // Predicated region
  $region6: #{_forward_impl.1} parent=0 // pred_check
    _
  $region7: #{_forward_impl.1} parent=0 // pred_check_branch
    %20 = sbr.rel (0) target = $region9
  $region8: #{_forward_impl.1} parent=0 // pred_region
    _
  $region9: #{_forward_impl.1} parent=0 // pred_fallthru
    _
  // Predicated region
  $region10: #{_forward_impl.1} parent=0 // pred_check
    _
  $region11: #{_forward_impl.1} parent=0 // pred_check_branch
    %22 = sbr.rel (0) target = $region13
  $region12: #{_forward_impl.1} parent=0 // pred_region
    _
  $region13: #{_forward_impl.1} parent=0 // pred_fallthru
    _
  // Predicated region
  $region14: #{_forward_impl.1} parent=0 // pred_check
    _
  $region15: #{_forward_impl.1} parent=0 // pred_check_branch
    %24 = sbr.rel (0) target = $region17
  $region16: #{_forward_impl.1} parent=0 // pred_region
    _
  $region17: #{_forward_impl.1} parent=0 // pred_fallthru
    _
  // Predicated region
  $region18: #{_forward_impl.1} parent=0 // pred_check
    _
  $region19: #{_forward_impl.1} parent=0 // pred_check_branch
    %26 = sbr.rel (0) target = $region21
  $region20: #{_forward_impl.1} parent=0 // pred_region
    _
  $region21: #{_forward_impl.1} parent=0 // pred_fallthru
    _
  // Predicated region
  $region22: #{_forward_impl.1} parent=0 // pred_check
    _
  $region23: #{_forward_impl.1} parent=0 // pred_check_branch
    %28 = sbr.rel (0) target = $region25
  $region24: #{_forward_impl.1} parent=0 // pred_region
    _
  $region25: #{_forward_impl.1} parent=0 // pred_fallthru
    _
  // Predicated region
  $region26: #{_forward_impl.1} parent=0 // pred_check
    _
  $region27: #{_forward_impl.1} parent=0 // pred_check_branch
    %30 = sbr.rel (0) target = $region29
  $region28: #{_forward_impl.1} parent=0 // pred_region
    _
  $region29: #{_forward_impl.1} parent=0 // pred_fallthru
    _
  // Predicated region
  $region30: #{_forward_impl.1} parent=0 // pred_check
    _
  $region31: #{_forward_impl.1} parent=0 // pred_check_branch
    %32 = sbr.rel (0) target = $region33
  $region32: #{_forward_impl.1} parent=0 // pred_region
    _
  $region33: #{_forward_impl.1} parent=0 // pred_fallthru
    _
  // Predicated region
  $region34: #{_forward_impl.1} parent=0 // pred_check
    _
  $region35: #{_forward_impl.1} parent=0 // pred_check_branch
    %34 = sbr.rel (0) target = $region37
  $region36: #{_forward_impl.1} parent=0 // pred_region
    _
  $region37: #{_forward_impl.1} parent=0 // pred_fallthru
    _
  // Predicated region
  $region38: #{_forward_impl.1} parent=0 // pred_check
    _
  $region39: #{_forward_impl.1} parent=0 // pred_check_branch
    %36 = sbr.rel (0) target = $region41
  $region40: #{_forward_impl.1} parent=0 // pred_region
    _
  $region41: #{_forward_impl.1} parent=0 // pred_fallthru
    _
  %v38 = vld [vmem:[%s0] sm:$0xff]
  %v39 = vld [vmem:[%s0 + $0x8] sm:$0xff]
  %v40 = vld [vmem:[%s0 + $0x10] sm:$0xff]
  %v41 = vld [vmem:[%s0 + $0x18] sm:$0xff]
  %v42 = vld [vmem:[%s0 + $0x20] sm:$0xff]
  %v43 = vld [vmem:[%s0 + $0x28] sm:$0xff]
  %v44 = vld [vmem:[%s0 + $0x30] sm:$0xff]
  %v45 = vld [vmem:[%s0 + $0x38] sm:$0xff]
  %v46 = vld [vmem:[%s2] sm:$0x3]
  %v48 = vlaneseq
  %v49 = vshrl.u32 %v48, 7
  %v50 = vsub.s32 0, %v49
  %v51 = vrot.slane %v46, %v50
  %v52 = vlaneseq
  %v53 = vshrl.u32 %v52, 7
  %v54 = vsub.s32 1, %v53
  %v55 = vrot.slane %v46, %v54
  %v58 = vsub.f32 %v38, %v51
  %v59 = vsub.f32 %v39, %v55
  %v60 = vsub.f32 %v40, %v51
  %v61 = vsub.f32 %v41, %v55
  %v62 = vsub.f32 %v42, %v51
  %v63 = vsub.f32 %v43, %v55
  %v64 = vsub.f32 %v44, %v51
  %v65 = vsub.f32 %v45, %v55
  %v66 = vld [vmem:[%s3] sm:$0x3]
  %v68 = vlaneseq
  %v69 = vshrl.u32 %v68, 7
  %v70 = vsub.s32 0, %v69
  %v71 = vrot.slane %v66, %v70
  %v72 = vlaneseq
  %v73 = vshrl.u32 %v72, 7
  %v74 = vsub.s32 1, %v73
  %v75 = vrot.slane %v66, %v74
  %v78 = vmul.f32 %v58, %v71
  %v79 = vmul.f32 %v59, %v75
  %v80 = vmul.f32 %v60, %v71
  %v81 = vmul.f32 %v61, %v75
  %v82 = vmul.f32 %v62, %v71
  %v83 = vmul.f32 %v63, %v75
  %v84 = vmul.f32 %v64, %v71
  %v85 = vmul.f32 %v65, %v75
  %v86 = vpack.c.bf16 %v80, %v78
  %v87 = vpack.c.bf16 %v81, %v79
  %v88 = vpack.c.bf16 %v84, %v82
  %v89 = vpack.c.bf16 %v85, %v83
  %v90 = vld [vmem:[%s4] sm:$0xf]
  %v91 = vld [vmem:[%s4 + $0x4] sm:$0xf]
  %v92 = vld [vmem:[%s4 + $0x8] sm:$0xf]
  %v93 = vld [vmem:[%s4 + $0xc] sm:$0xf]
  %v94 = vld [vmem:[%s4 + $0x10] sm:$0xf]
  %v95 = vld [vmem:[%s4 + $0x14] sm:$0xf]
  %v96 = vld [vmem:[%s4 + $0x18] sm:$0xf]
  %v97 = vld [vmem:[%s4 + $0x1c] sm:$0xf]
  %v98 = vld [vmem:[%s4 + $0x20] sm:$0xf]
  %v99 = vld [vmem:[%s4 + $0x24] sm:$0xf]
  %v100 = vld [vmem:[%s4 + $0x28] sm:$0xf]
  %v101 = vld [vmem:[%s4 + $0x2c] sm:$0xf]
  %v102 = vld [vmem:[%s4 + $0x30] sm:$0xf]
  %v103 = vld [vmem:[%s4 + $0x34] sm:$0xf]
  %v104 = vld [vmem:[%s4 + $0x38] sm:$0xf]
  %v105 = vld [vmem:[%s4 + $0x3c] sm:$0xf]
  %v106 = vld [vmem:[%s4 + $0x40] sm:$0xf]
  %v107 = vld [vmem:[%s4 + $0x44] sm:$0xf]
  %v108 = vld [vmem:[%s4 + $0x48] sm:$0xf]
  %v109 = vld [vmem:[%s4 + $0x4c] sm:$0xf]
  %v110 = vld [vmem:[%s4 + $0x50] sm:$0xf]
  %v111 = vld [vmem:[%s4 + $0x54] sm:$0xf]
  %v112 = vld [vmem:[%s4 + $0x58] sm:$0xf]
  %v113 = vld [vmem:[%s4 + $0x5c] sm:$0xf]
  %v114 = vld [vmem:[%s5] sm:$0x1]
  %v116 = vlaneseq
  %v117 = vshrl.u32 %v116, 7
  %v118 = vsub.s32 0, %v117
  %v119 = vrot.slane %v114, %v118
  %v145 = vunpack.c.l.b16 %v90
  %v146 = vunpack.c.l.b16 %v91
  %v147 = vunpack.c.l.b16 %v92
  %v148 = vunpack.c.l.b16 %v93
  %v149 = vunpack.c.l.b16 %v94
  %v150 = vunpack.c.l.b16 %v95
  %v151 = vunpack.c.l.b16 %v96
  %v152 = vunpack.c.l.b16 %v97
  %v153 = vunpack.c.l.b16 %v98
  %v154 = vunpack.c.l.b16 %v99
  %v155 = vunpack.c.l.b16 %v100
  %v156 = vunpack.c.l.b16 %v101
  %v157 = vunpack.c.l.b16 %v102
  %v158 = vunpack.c.l.b16 %v103
  %v159 = vunpack.c.l.b16 %v104
  %v160 = vunpack.c.l.b16 %v105
  %v161 = vunpack.c.l.b16 %v106
  %v162 = vunpack.c.l.b16 %v107
  %v163 = vunpack.c.l.b16 %v108
  %v164 = vunpack.c.l.b16 %v109
  %v165 = vunpack.c.l.b16 %v110
  %v166 = vunpack.c.l.b16 %v111
  %v167 = vunpack.c.l.b16 %v112
  %v168 = vunpack.c.l.b16 %v113
  %v169 = vpack.c.b16 %v146, %v145
  %v170 = vpack.c.b16 %v148, %v147
  %v171 = vpack.c.b16 %v150, %v149
  %v172 = vpack.c.b16 %v152, %v151
  %v173 = vpack.c.b16 %v154, %v153
  %v174 = vpack.c.b16 %v156, %v155
  %v175 = vpack.c.b16 %v158, %v157
  %v176 = vpack.c.b16 %v160, %v159
  %v177 = vpack.c.b16 %v162, %v161
  %v178 = vpack.c.b16 %v164, %v163
  %v179 = vpack.c.b16 %v166, %v165
  %v180 = vpack.c.b16 %v168, %v167
  %vm193 = vcmask 523264
  %v195 = vsel %vm193, %v87, 0
  %v198 = vsel %vm193, %v89, 0
  %200 = vmatprep.subr.bf16.mxu0 0
  %201 = vmatpush1.bf16.msra.mxu0 %v176
  %202 = vmatprep.subr.bf16.mxu0 0
  %203 = vmatpush1.bf16.msra.mxu0 %v175
  %204 = vmatprep.subr.bf16.mxu0 0
  %205 = vmatpush1.bf16.msra.mxu0 %v174
  %206 = vmatprep.subr.bf16.mxu0 0
  %207 = vmatpush1.bf16.msra.mxu0 %v173
  %208 = vmatprep.subr.bf16.mxu0 0
  %209 = vmatpush1.bf16.msra.mxu0 %v172
  %210 = vmatprep.subr.bf16.mxu0 0
  %211 = vmatpush1.bf16.msra.mxu0 %v171
  %212 = vmatprep.subr.bf16.mxu0 0
  %213 = vmatpush1.bf16.msra.mxu0 %v170
  %214 = vmatprep.subr.bf16.mxu0 0
  %215 = vmatpush1.bf16.msra.mxu0 %v169
  %216 = vmatprep.subr.bf16.mxu0 0
  %217 = vmatpush2.bf16.msra.mxu0 0
  %218 = vmatprep.subr.bf16.mxu0 0
  %219 = vmatpush2.bf16.msra.mxu0 0
  %220 = vmatprep.subr.bf16.mxu0 0
  %221 = vmatpush2.bf16.msra.mxu0 0
  %222 = vmatprep.subr.bf16.mxu0 0
  %223 = vmatpush2.bf16.msra.mxu0 0
  %224 = vmatprep.subr.bf16.mxu0 0
  %225 = vmatpush2.bf16.msra.mxu0 %v180
  %226 = vmatprep.subr.bf16.mxu0 0
  %227 = vmatpush2.bf16.msra.mxu0 %v179
  %228 = vmatprep.subr.bf16.mxu0 0
  %229 = vmatpush2.bf16.msra.mxu0 %v178
  %230 = vmatprep.subr.bf16.mxu0 0
  %231 = vmatpush2.bf16.msra.mxu0 %v177
  %232 = vmatprep.mubr.bf16.mxu0 %v195
  %233 = vmatmul.mubr.bf16.gmra.mxu0 %v86
  %v234 = vpop.f32.mrf.mxu0
  %v235 = vadd.f32 %v119, %v234
  %v236 = vpop.f32.mrf.mxu0
  %v237 = vpop.f32.mrf.mxu0
  %v238 = vadd.f32 %v119, %v237
  %v239 = vpop.f32.mrf.mxu0
  %240 = vmatprep.mubr.bf16.mxu0 %v198
  %241 = vmatmul.mubr.bf16.gmra.mxu0 %v88
  %v242 = vpop.f32.mrf.mxu0
  %v243 = vadd.f32 %v119, %v242
  %v244 = vpop.f32.mrf.mxu0
  %v245 = vpop.f32.mrf.mxu0
  %v246 = vadd.f32 %v119, %v245
  %v247 = vpop.f32.mrf.mxu0
  %248 = vdwg.mxu0
  %v249 = vld [vmem:[%s6] sm:$0xff]
  %v250 = vld [vmem:[%s6 + $0x8] sm:$0xff]
  %v251 = vadd.f32 %v235, %v249
  %v252 = vadd.f32 %v238, %v250
  %v253 = vadd.f32 %v243, %v249
  %v254 = vadd.f32 %v246, %v250
  %255 = vadd.xlane.f32.xlu0 %v251
  %v256 = vpop.xlane.xlu0 %255
  %257 = vadd.xlane.f32.xlu0 %v252
  %v258 = vpop.xlane.xlu0 %257
  %259 = vadd.xlane.f32.xlu0 %v253
  %v260 = vpop.xlane.xlu0 %259
  %261 = vadd.xlane.f32.xlu0 %v254
  %v262 = vpop.xlane.xlu0 %261
  %v263 = vrcp.pop 128.0
  %v264 = vmul.f32 %v256, %v263
  %v265 = vmul.f32 %v258, %v263
  %v266 = vmul.f32 %v260, %v263
  %v267 = vmul.f32 %v262, %v263
  %v268 = vsub.f32 %v251, %v264
  %v269 = vsub.f32 %v252, %v265
  %v270 = vsub.f32 %v253, %v266
  %v271 = vsub.f32 %v254, %v267
  %v272 = vmul.f32 %v268, %v268
  %v273 = vmul.f32 %v269, %v269
  %v274 = vmul.f32 %v270, %v270
  %v275 = vmul.f32 %v271, %v271
  %276 = vadd.xlane.f32.xlu0 %v272
  %v277 = vpop.xlane.xlu0 %276
  %278 = vadd.xlane.f32.xlu0 %v273
  %v279 = vpop.xlane.xlu0 %278
  %280 = vadd.xlane.f32.xlu0 %v274
  %v281 = vpop.xlane.xlu0 %280
  %282 = vadd.xlane.f32.xlu0 %v275
  %v283 = vpop.xlane.xlu0 %282
  %v284 = vmul.f32 %v277, %v263
  %v285 = vmul.f32 %v279, %v263
  %v286 = vmul.f32 %v281, %v263
  %v287 = vmul.f32 %v283, %v263
  %v288 = vadd.f32 %v284, 1e-05
  %v289 = vadd.f32 %v285, 1e-05
  %v290 = vadd.f32 %v286, 1e-05
  %v291 = vadd.f32 %v287, 1e-05
  %v292 = vrsqrt.pop %v288
  %v293 = vrsqrt.pop %v289
  %v294 = vrsqrt.pop %v290
  %v295 = vrsqrt.pop %v291
  %v296 = vmul.f32 %v268, %v292
  %v297 = vmul.f32 %v269, %v293
  %v298 = vmul.f32 %v270, %v294
  %v299 = vmul.f32 %v271, %v295
  %v300 = vld [vmem:[%s7] sm:$0x1]
  %v302 = vlaneseq
  %v303 = vshrl.u32 %v302, 7
  %v304 = vsub.s32 0, %v303
  %v305 = vrot.slane %v300, %v304
  %v307 = vmul.f32 %v296, %v305
  %v308 = vmul.f32 %v297, %v305
  %v309 = vmul.f32 %v298, %v305
  %v310 = vmul.f32 %v299, %v305
  %v311 = vld [vmem:[%s8] sm:$0x1]
  %v313 = vlaneseq
  %v314 = vshrl.u32 %v313, 7
  %v315 = vsub.s32 0, %v314
  %v316 = vrot.slane %v311, %v315
  %v318 = vadd.f32 %v307, %v316
  %v319 = vadd.f32 %v308, %v316
  %v320 = vadd.f32 %v309, %v316
  %v321 = vadd.f32 %v310, %v316
  %v322 = vpack.c.bf16 %v319, %v318
  %v323 = vpack.c.bf16 %v321, %v320
  %v324 = vld [vmem:[%s9] sm:$0xf]
  %v325 = vld [vmem:[%s9 + $0x4] sm:$0xf]
  %v326 = vld [vmem:[%s9 + $0x8] sm:$0xf]
  %v327 = vld [vmem:[%s9 + $0xc] sm:$0xf]
  %v328 = vld [vmem:[%s9 + $0x10] sm:$0xf]
  %v329 = vld [vmem:[%s9 + $0x14] sm:$0xf]
  %v330 = vld [vmem:[%s9 + $0x18] sm:$0xf]
  %v331 = vld [vmem:[%s9 + $0x1c] sm:$0xf]
  %v332 = vld [vmem:[%s9 + $0x20] sm:$0xf]
  %v333 = vld [vmem:[%s9 + $0x24] sm:$0xf]
  %v334 = vld [vmem:[%s9 + $0x28] sm:$0xf]
  %v335 = vld [vmem:[%s9 + $0x2c] sm:$0xf]
  %v336 = vld [vmem:[%s9 + $0x30] sm:$0xf]
  %v337 = vld [vmem:[%s9 + $0x34] sm:$0xf]
  %v338 = vld [vmem:[%s9 + $0x38] sm:$0xf]
  %v339 = vld [vmem:[%s9 + $0x3c] sm:$0xf]
  %v356 = vunpack.c.l.b16 %v324
  %v357 = vunpack.c.l.b16 %v325
  %v358 = vunpack.c.l.b16 %v326
  %v359 = vunpack.c.l.b16 %v327
  %v360 = vunpack.c.l.b16 %v328
  %v361 = vunpack.c.l.b16 %v329
  %v362 = vunpack.c.l.b16 %v330
  %v363 = vunpack.c.l.b16 %v331
  %v364 = vunpack.c.l.b16 %v332
  %v365 = vunpack.c.l.b16 %v333
  %v366 = vunpack.c.l.b16 %v334
  %v367 = vunpack.c.l.b16 %v335
  %v368 = vunpack.c.l.b16 %v336
  %v369 = vunpack.c.l.b16 %v337
  %v370 = vunpack.c.l.b16 %v338
  %v371 = vunpack.c.l.b16 %v339
  %v372 = vpack.c.b16 %v357, %v356
  %v373 = vpack.c.b16 %v359, %v358
  %v374 = vpack.c.b16 %v361, %v360
  %v375 = vpack.c.b16 %v363, %v362
  %v376 = vpack.c.b16 %v365, %v364
  %v377 = vpack.c.b16 %v367, %v366
  %v378 = vpack.c.b16 %v369, %v368
  %v379 = vpack.c.b16 %v371, %v370
  %388 = vmatprep.subr.bf16.mxu0 0
  %389 = vmatpush1.bf16.msra.mxu0 %v379
  %390 = vmatprep.subr.bf16.mxu0 0
  %391 = vmatpush1.bf16.msra.mxu0 %v378
  %392 = vmatprep.subr.bf16.mxu0 0
  %393 = vmatpush1.bf16.msra.mxu0 %v377
  %394 = vmatprep.subr.bf16.mxu0 0
  %395 = vmatpush1.bf16.msra.mxu0 %v376
  %396 = vmatprep.subr.bf16.mxu0 0
  %397 = vmatpush1.bf16.msra.mxu0 %v375
  %398 = vmatprep.subr.bf16.mxu0 0
  %399 = vmatpush1.bf16.msra.mxu0 %v374
  %400 = vmatprep.subr.bf16.mxu0 0
  %401 = vmatpush1.bf16.msra.mxu0 %v373
  %402 = vmatprep.subr.bf16.mxu0 0
  %403 = vmatpush1.bf16.msra.mxu0 %v372
  %404 = vmatprep.subr.bf16.mxu0 0
  %405 = vmatpush2.bf16.msra.mxu0 0
  %406 = vmatprep.subr.bf16.mxu0 0
  %407 = vmatpush2.bf16.msra.mxu0 0
  %408 = vmatprep.subr.bf16.mxu0 0
  %409 = vmatpush2.bf16.msra.mxu0 0
  %410 = vmatprep.subr.bf16.mxu0 0
  %411 = vmatpush2.bf16.msra.mxu0 0
  %412 = vmatprep.subr.bf16.mxu0 0
  %413 = vmatpush2.bf16.msra.mxu0 0
  %414 = vmatprep.subr.bf16.mxu0 0
  %415 = vmatpush2.bf16.msra.mxu0 0
  %416 = vmatprep.subr.bf16.mxu0 0
  %417 = vmatpush2.bf16.msra.mxu0 0
  %418 = vmatprep.subr.bf16.mxu0 0
  %419 = vmatpush2.bf16.msra.mxu0 0
  %420 = vmatprep.mubr.bf16.mxu0 0
  %421 = vmatmul.mubr.bf16.gmra.mxu0 %v322
  %v422 = vpop.f32.mrf.mxu0
  %v423 = vadd.f32 0.0, %v422
  %v424 = vpop.f32.mrf.mxu0
  %v425 = vpop.f32.mrf.mxu0
  %v426 = vadd.f32 0.0, %v425
  %v427 = vpop.f32.mrf.mxu0
  %428 = vmatprep.mubr.bf16.mxu0 0
  %429 = vmatmul.mubr.bf16.gmra.mxu0 %v323
  %v430 = vpop.f32.mrf.mxu0
  %v431 = vadd.f32 0.0, %v430
  %v432 = vpop.f32.mrf.mxu0
  %v433 = vpop.f32.mrf.mxu0
  %v434 = vadd.f32 0.0, %v433
  %v435 = vpop.f32.mrf.mxu0
  %436 = vdwg.mxu0
  %v437 = vadd.f32 %v423, %v426
  %v438 = vrot.slane %v437, 4
  %v439 = vadd.f32 %v437, %v438
  %v440 = vrot.slane %v439, 2
  %v441 = vadd.f32 %v439, %v440
  %v442 = vrot.slane %v441, 1
  %v443 = vadd.f32 %v441, %v442
  %v444 = vadd.f32 %v431, %v434
  %v445 = vrot.slane %v444, 4
  %v446 = vadd.f32 %v444, %v445
  %v447 = vrot.slane %v446, 2
  %v448 = vadd.f32 %v446, %v447
  %v449 = vrot.slane %v448, 1
  %v450 = vadd.f32 %v448, %v449
  %v451 = vrcp.pop 16.0
  %v452 = vmul.f32 %v443, %v451
  %v453 = vmul.f32 %v450, %v451
  %vm456 = vcmask 1041409
  %v457 = vsel %vm456, %v453, %v452
  %459 = vst [vmem:[%s10] sm:$0x3] %v457
  %v460 = vld [vmem:[%s1] sm:$0xff]
  %v461 = vld [vmem:[%s1 + $0x8] sm:$0xff]
  %v462 = vld [vmem:[%s1 + $0x10] sm:$0xff]
  %v463 = vld [vmem:[%s1 + $0x18] sm:$0xff]
  %v464 = vld [vmem:[%s1 + $0x20] sm:$0xff]
  %v465 = vld [vmem:[%s1 + $0x28] sm:$0xff]
  %v466 = vld [vmem:[%s1 + $0x30] sm:$0xff]
  %v467 = vld [vmem:[%s1 + $0x38] sm:$0xff]
  %v468 = vld [vmem:[%s2] sm:$0x3]
  %v470 = vlaneseq
  %v471 = vshrl.u32 %v470, 7
  %v472 = vsub.s32 0, %v471
  %v473 = vrot.slane %v468, %v472
  %v474 = vlaneseq
  %v475 = vshrl.u32 %v474, 7
  %v476 = vsub.s32 1, %v475
  %v477 = vrot.slane %v468, %v476
  %v480 = vsub.f32 %v460, %v473
  %v481 = vsub.f32 %v461, %v477
  %v482 = vsub.f32 %v462, %v473
  %v483 = vsub.f32 %v463, %v477
  %v484 = vsub.f32 %v464, %v473
  %v485 = vsub.f32 %v465, %v477
  %v486 = vsub.f32 %v466, %v473
  %v487 = vsub.f32 %v467, %v477
  %v488 = vld [vmem:[%s3] sm:$0x3]
  %v490 = vlaneseq
  %v491 = vshrl.u32 %v490, 7
  %v492 = vsub.s32 0, %v491
  %v493 = vrot.slane %v488, %v492
  %v494 = vlaneseq
  %v495 = vshrl.u32 %v494, 7
  %v496 = vsub.s32 1, %v495
  %v497 = vrot.slane %v488, %v496
  %v500 = vmul.f32 %v480, %v493
  %v501 = vmul.f32 %v481, %v497
  %v502 = vmul.f32 %v482, %v493
  %v503 = vmul.f32 %v483, %v497
  %v504 = vmul.f32 %v484, %v493
  %v505 = vmul.f32 %v485, %v497
  %v506 = vmul.f32 %v486, %v493
  %v507 = vmul.f32 %v487, %v497
  %v508 = vpack.c.bf16 %v502, %v500
  %v509 = vpack.c.bf16 %v503, %v501
  %v510 = vpack.c.bf16 %v506, %v504
  %v511 = vpack.c.bf16 %v507, %v505
  %v512 = vld [vmem:[%s4] sm:$0xf]
  %v513 = vld [vmem:[%s4 + $0x4] sm:$0xf]
  %v514 = vld [vmem:[%s4 + $0x8] sm:$0xf]
  %v515 = vld [vmem:[%s4 + $0xc] sm:$0xf]
  %v516 = vld [vmem:[%s4 + $0x10] sm:$0xf]
  %v517 = vld [vmem:[%s4 + $0x14] sm:$0xf]
  %v518 = vld [vmem:[%s4 + $0x18] sm:$0xf]
  %v519 = vld [vmem:[%s4 + $0x1c] sm:$0xf]
  %v520 = vld [vmem:[%s4 + $0x20] sm:$0xf]
  %v521 = vld [vmem:[%s4 + $0x24] sm:$0xf]
  %v522 = vld [vmem:[%s4 + $0x28] sm:$0xf]
  %v523 = vld [vmem:[%s4 + $0x2c] sm:$0xf]
  %v524 = vld [vmem:[%s4 + $0x30] sm:$0xf]
  %v525 = vld [vmem:[%s4 + $0x34] sm:$0xf]
  %v526 = vld [vmem:[%s4 + $0x38] sm:$0xf]
  %v527 = vld [vmem:[%s4 + $0x3c] sm:$0xf]
  %v528 = vld [vmem:[%s4 + $0x40] sm:$0xf]
  %v529 = vld [vmem:[%s4 + $0x44] sm:$0xf]
  %v530 = vld [vmem:[%s4 + $0x48] sm:$0xf]
  %v531 = vld [vmem:[%s4 + $0x4c] sm:$0xf]
  %v532 = vld [vmem:[%s4 + $0x50] sm:$0xf]
  %v533 = vld [vmem:[%s4 + $0x54] sm:$0xf]
  %v534 = vld [vmem:[%s4 + $0x58] sm:$0xf]
  %v535 = vld [vmem:[%s4 + $0x5c] sm:$0xf]
  %v536 = vld [vmem:[%s5] sm:$0x1]
  %v538 = vlaneseq
  %v539 = vshrl.u32 %v538, 7
  %v540 = vsub.s32 0, %v539
  %v541 = vrot.slane %v536, %v540
  %v567 = vunpack.c.l.b16 %v512
  %v568 = vunpack.c.l.b16 %v513
  %v569 = vunpack.c.l.b16 %v514
  %v570 = vunpack.c.l.b16 %v515
  %v571 = vunpack.c.l.b16 %v516
  %v572 = vunpack.c.l.b16 %v517
  %v573 = vunpack.c.l.b16 %v518
  %v574 = vunpack.c.l.b16 %v519
  %v575 = vunpack.c.l.b16 %v520
  %v576 = vunpack.c.l.b16 %v521
  %v577 = vunpack.c.l.b16 %v522
  %v578 = vunpack.c.l.b16 %v523
  %v579 = vunpack.c.l.b16 %v524
  %v580 = vunpack.c.l.b16 %v525
  %v581 = vunpack.c.l.b16 %v526
  %v582 = vunpack.c.l.b16 %v527
  %v583 = vunpack.c.l.b16 %v528
  %v584 = vunpack.c.l.b16 %v529
  %v585 = vunpack.c.l.b16 %v530
  %v586 = vunpack.c.l.b16 %v531
  %v587 = vunpack.c.l.b16 %v532
  %v588 = vunpack.c.l.b16 %v533
  %v589 = vunpack.c.l.b16 %v534
  %v590 = vunpack.c.l.b16 %v535
  %v591 = vpack.c.b16 %v568, %v567
  %v592 = vpack.c.b16 %v570, %v569
  %v593 = vpack.c.b16 %v572, %v571
  %v594 = vpack.c.b16 %v574, %v573
  %v595 = vpack.c.b16 %v576, %v575
  %v596 = vpack.c.b16 %v578, %v577
  %v597 = vpack.c.b16 %v580, %v579
  %v598 = vpack.c.b16 %v582, %v581
  %v599 = vpack.c.b16 %v584, %v583
  %v600 = vpack.c.b16 %v586, %v585
  %v601 = vpack.c.b16 %v588, %v587
  %v602 = vpack.c.b16 %v590, %v589
  %v616 = vsel %vm193, %v509, 0
  %v619 = vsel %vm193, %v511, 0
  %621 = vmatprep.subr.bf16.mxu0 0
  %622 = vmatpush1.bf16.msra.mxu0 %v598
  %623 = vmatprep.subr.bf16.mxu0 0
  %624 = vmatpush1.bf16.msra.mxu0 %v597
  %625 = vmatprep.subr.bf16.mxu0 0
  %626 = vmatpush1.bf16.msra.mxu0 %v596
  %627 = vmatprep.subr.bf16.mxu0 0
  %628 = vmatpush1.bf16.msra.mxu0 %v595
  %629 = vmatprep.subr.bf16.mxu0 0
  %630 = vmatpush1.bf16.msra.mxu0 %v594
  %631 = vmatprep.subr.bf16.mxu0 0
  %632 = vmatpush1.bf16.msra.mxu0 %v593
  %633 = vmatprep.subr.bf16.mxu0 0
  %634 = vmatpush1.bf16.msra.mxu0 %v592
  %635 = vmatprep.subr.bf16.mxu0 0
  %636 = vmatpush1.bf16.msra.mxu0 %v591
  %637 = vmatprep.subr.bf16.mxu0 0
  %638 = vmatpush2.bf16.msra.mxu0 0
  %639 = vmatprep.subr.bf16.mxu0 0
  %640 = vmatpush2.bf16.msra.mxu0 0
  %641 = vmatprep.subr.bf16.mxu0 0
  %642 = vmatpush2.bf16.msra.mxu0 0
  %643 = vmatprep.subr.bf16.mxu0 0
  %644 = vmatpush2.bf16.msra.mxu0 0
  %645 = vmatprep.subr.bf16.mxu0 0
  %646 = vmatpush2.bf16.msra.mxu0 %v602
  %647 = vmatprep.subr.bf16.mxu0 0
  %648 = vmatpush2.bf16.msra.mxu0 %v601
  %649 = vmatprep.subr.bf16.mxu0 0
  %650 = vmatpush2.bf16.msra.mxu0 %v600
  %651 = vmatprep.subr.bf16.mxu0 0
  %652 = vmatpush2.bf16.msra.mxu0 %v599
  %653 = vmatprep.mubr.bf16.mxu0 %v616
  %654 = vmatmul.mubr.bf16.gmra.mxu0 %v508
  %v655 = vpop.f32.mrf.mxu0
  %v656 = vadd.f32 %v541, %v655
  %v657 = vpop.f32.mrf.mxu0
  %v658 = vpop.f32.mrf.mxu0
  %v659 = vadd.f32 %v541, %v658
  %v660 = vpop.f32.mrf.mxu0
  %661 = vmatprep.mubr.bf16.mxu0 %v619
  %662 = vmatmul.mubr.bf16.gmra.mxu0 %v510
  %v663 = vpop.f32.mrf.mxu0
  %v664 = vadd.f32 %v541, %v663
  %v665 = vpop.f32.mrf.mxu0
  %v666 = vpop.f32.mrf.mxu0
  %v667 = vadd.f32 %v541, %v666
  %v668 = vpop.f32.mrf.mxu0
  %669 = vdwg.mxu0
  %v670 = vld [vmem:[%s6] sm:$0xff]
  %v671 = vld [vmem:[%s6 + $0x8] sm:$0xff]
  %v672 = vadd.f32 %v656, %v670
  %v673 = vadd.f32 %v659, %v671
  %v674 = vadd.f32 %v664, %v670
  %v675 = vadd.f32 %v667, %v671
  %676 = vadd.xlane.f32.xlu0 %v672
  %v677 = vpop.xlane.xlu0 %676
  %678 = vadd.xlane.f32.xlu0 %v673
  %v679 = vpop.xlane.xlu0 %678
  %680 = vadd.xlane.f32.xlu0 %v674
  %v681 = vpop.xlane.xlu0 %680
  %682 = vadd.xlane.f32.xlu0 %v675
  %v683 = vpop.xlane.xlu0 %682
  %v684 = vmul.f32 %v677, %v263
  %v685 = vmul.f32 %v679, %v263
  %v686 = vmul.f32 %v681, %v263
  %v687 = vmul.f32 %v683, %v263
  %v688 = vsub.f32 %v672, %v684
  %v689 = vsub.f32 %v673, %v685
  %v690 = vsub.f32 %v674, %v686
  %v691 = vsub.f32 %v675, %v687
  %v692 = vmul.f32 %v688, %v688
  %v693 = vmul.f32 %v689, %v689
  %v694 = vmul.f32 %v690, %v690
  %v695 = vmul.f32 %v691, %v691
  %696 = vadd.xlane.f32.xlu0 %v692
  %v697 = vpop.xlane.xlu0 %696
  %698 = vadd.xlane.f32.xlu0 %v693
  %v699 = vpop.xlane.xlu0 %698
  %700 = vadd.xlane.f32.xlu0 %v694
  %v701 = vpop.xlane.xlu0 %700
  %702 = vadd.xlane.f32.xlu0 %v695
  %v703 = vpop.xlane.xlu0 %702
  %v704 = vmul.f32 %v697, %v263
  %v705 = vmul.f32 %v699, %v263
  %v706 = vmul.f32 %v701, %v263
  %v707 = vmul.f32 %v703, %v263
  %v708 = vadd.f32 %v704, 1e-05
  %v709 = vadd.f32 %v705, 1e-05
  %v710 = vadd.f32 %v706, 1e-05
  %v711 = vadd.f32 %v707, 1e-05
  %v712 = vrsqrt.pop %v708
  %v713 = vrsqrt.pop %v709
  %v714 = vrsqrt.pop %v710
  %v715 = vrsqrt.pop %v711
  %v716 = vmul.f32 %v688, %v712
  %v717 = vmul.f32 %v689, %v713
  %v718 = vmul.f32 %v690, %v714
  %v719 = vmul.f32 %v691, %v715
  %v720 = vld [vmem:[%s7] sm:$0x1]
  %v722 = vlaneseq
  %v723 = vshrl.u32 %v722, 7
  %v724 = vsub.s32 0, %v723
  %v725 = vrot.slane %v720, %v724
  %v727 = vmul.f32 %v716, %v725
  %v728 = vmul.f32 %v717, %v725
  %v729 = vmul.f32 %v718, %v725
  %v730 = vmul.f32 %v719, %v725
  %v731 = vld [vmem:[%s8] sm:$0x1]
  %v733 = vlaneseq
  %v734 = vshrl.u32 %v733, 7
  %v735 = vsub.s32 0, %v734
  %v736 = vrot.slane %v731, %v735
  %v738 = vadd.f32 %v727, %v736
  %v739 = vadd.f32 %v728, %v736
  %v740 = vadd.f32 %v729, %v736
  %v741 = vadd.f32 %v730, %v736
  %v742 = vpack.c.bf16 %v739, %v738
  %v743 = vpack.c.bf16 %v741, %v740
  %v744 = vld [vmem:[%s9] sm:$0xf]
  %v745 = vld [vmem:[%s9 + $0x4] sm:$0xf]
  %v746 = vld [vmem:[%s9 + $0x8] sm:$0xf]
  %v747 = vld [vmem:[%s9 + $0xc] sm:$0xf]
  %v748 = vld [vmem:[%s9 + $0x10] sm:$0xf]
  %v749 = vld [vmem:[%s9 + $0x14] sm:$0xf]
  %v750 = vld [vmem:[%s9 + $0x18] sm:$0xf]
  %v751 = vld [vmem:[%s9 + $0x1c] sm:$0xf]
  %v752 = vld [vmem:[%s9 + $0x20] sm:$0xf]
  %v753 = vld [vmem:[%s9 + $0x24] sm:$0xf]
  %v754 = vld [vmem:[%s9 + $0x28] sm:$0xf]
  %v755 = vld [vmem:[%s9 + $0x2c] sm:$0xf]
  %v756 = vld [vmem:[%s9 + $0x30] sm:$0xf]
  %v757 = vld [vmem:[%s9 + $0x34] sm:$0xf]
  %v758 = vld [vmem:[%s9 + $0x38] sm:$0xf]
  %v759 = vld [vmem:[%s9 + $0x3c] sm:$0xf]
  %v776 = vunpack.c.l.b16 %v744
  %v777 = vunpack.c.l.b16 %v745
  %v778 = vunpack.c.l.b16 %v746
  %v779 = vunpack.c.l.b16 %v747
  %v780 = vunpack.c.l.b16 %v748
  %v781 = vunpack.c.l.b16 %v749
  %v782 = vunpack.c.l.b16 %v750
  %v783 = vunpack.c.l.b16 %v751
  %v784 = vunpack.c.l.b16 %v752
  %v785 = vunpack.c.l.b16 %v753
  %v786 = vunpack.c.l.b16 %v754
  %v787 = vunpack.c.l.b16 %v755
  %v788 = vunpack.c.l.b16 %v756
  %v789 = vunpack.c.l.b16 %v757
  %v790 = vunpack.c.l.b16 %v758
  %v791 = vunpack.c.l.b16 %v759
  %v792 = vpack.c.b16 %v777, %v776
  %v793 = vpack.c.b16 %v779, %v778
  %v794 = vpack.c.b16 %v781, %v780
  %v795 = vpack.c.b16 %v783, %v782
  %v796 = vpack.c.b16 %v785, %v784
  %v797 = vpack.c.b16 %v787, %v786
  %v798 = vpack.c.b16 %v789, %v788
  %v799 = vpack.c.b16 %v791, %v790
  %808 = vmatprep.subr.bf16.mxu0 0
  %809 = vmatpush1.bf16.msra.mxu0 %v799
  %810 = vmatprep.subr.bf16.mxu0 0
  %811 = vmatpush1.bf16.msra.mxu0 %v798
  %812 = vmatprep.subr.bf16.mxu0 0
  %813 = vmatpush1.bf16.msra.mxu0 %v797
  %814 = vmatprep.subr.bf16.mxu0 0
  %815 = vmatpush1.bf16.msra.mxu0 %v796
  %816 = vmatprep.subr.bf16.mxu0 0
  %817 = vmatpush1.bf16.msra.mxu0 %v795
  %818 = vmatprep.subr.bf16.mxu0 0
  %819 = vmatpush1.bf16.msra.mxu0 %v794
  %820 = vmatprep.subr.bf16.mxu0 0
  %821 = vmatpush1.bf16.msra.mxu0 %v793
  %822 = vmatprep.subr.bf16.mxu0 0
  %823 = vmatpush1.bf16.msra.mxu0 %v792
  %824 = vmatprep.subr.bf16.mxu0 0
  %825 = vmatpush2.bf16.msra.mxu0 0
  %826 = vmatprep.subr.bf16.mxu0 0
  %827 = vmatpush2.bf16.msra.mxu0 0
  %828 = vmatprep.subr.bf16.mxu0 0
  %829 = vmatpush2.bf16.msra.mxu0 0
  %830 = vmatprep.subr.bf16.mxu0 0
  %831 = vmatpush2.bf16.msra.mxu0 0
  %832 = vmatprep.subr.bf16.mxu0 0
  %833 = vmatpush2.bf16.msra.mxu0 0
  %834 = vmatprep.subr.bf16.mxu0 0
  %835 = vmatpush2.bf16.msra.mxu0 0
  %836 = vmatprep.subr.bf16.mxu0 0
  %837 = vmatpush2.bf16.msra.mxu0 0
  %838 = vmatprep.subr.bf16.mxu0 0
  %839 = vmatpush2.bf16.msra.mxu0 0
  %840 = vmatprep.mubr.bf16.mxu0 0
  %841 = vmatmul.mubr.bf16.gmra.mxu0 %v742
  %v842 = vpop.f32.mrf.mxu0
  %v843 = vadd.f32 0.0, %v842
  %v844 = vpop.f32.mrf.mxu0
  %v845 = vpop.f32.mrf.mxu0
  %v846 = vadd.f32 0.0, %v845
  %v847 = vpop.f32.mrf.mxu0
  %848 = vmatprep.mubr.bf16.mxu0 0
  %849 = vmatmul.mubr.bf16.gmra.mxu0 %v743
  %v850 = vpop.f32.mrf.mxu0
  %v851 = vadd.f32 0.0, %v850
  %v852 = vpop.f32.mrf.mxu0
  %v853 = vpop.f32.mrf.mxu0
  %v854 = vadd.f32 0.0, %v853
  %v855 = vpop.f32.mrf.mxu0
  %856 = vdwg.mxu0
  %v857 = vadd.f32 %v843, %v846
  %v858 = vrot.slane %v857, 4
  %v859 = vadd.f32 %v857, %v858
  %v860 = vrot.slane %v859, 2
  %v861 = vadd.f32 %v859, %v860
  %v862 = vrot.slane %v861, 1
  %v863 = vadd.f32 %v861, %v862
  %v864 = vadd.f32 %v851, %v854
  %v865 = vrot.slane %v864, 4
  %v866 = vadd.f32 %v864, %v865
  %v867 = vrot.slane %v866, 2
  %v868 = vadd.f32 %v866, %v867
  %v869 = vrot.slane %v868, 1
  %v870 = vadd.f32 %v868, %v869
  %v871 = vmul.f32 %v863, %v451
  %v872 = vmul.f32 %v870, %v451
  %v875 = vsel %vm456, %v872, %v871
  %877 = vst [vmem:[%s11] sm:$0x3] %v875
  // Predicated region
  $region42: #{_forward_impl.1} parent=0 // pred_check
    _
  $region43: #{_forward_impl.1} parent=0 // pred_check_branch
    %879 = sbr.rel (0) target = $region45
  $region44: #{_forward_impl.1} parent=0 // pred_region
    _
  $region45: #{_forward_impl.1} parent=0 // pred_fallthru
    _
  // Predicated region
  $region46: #{_forward_impl.1} parent=0 // pred_check
    _
  $region47: #{_forward_impl.1} parent=0 // pred_check_branch
    %881 = sbr.rel (0) target = $region49
  $region48: #{_forward_impl.1} parent=0 // pred_region
    _
  $region49: #{_forward_impl.1} parent=0 // pred_fallthru
    _
  // Predicated region
  $region50: #{_forward_impl.1} parent=0 // pred_check
    _
  $region51: #{_forward_impl.1} parent=0 // pred_check_branch
    %883 = sbr.rel (0) target = $region53
  $region52: #{_forward_impl.1} parent=0 // pred_region
    _
  $region53: #{_forward_impl.1} parent=0 // pred_fallthru
    _
  // Predicated region
  $region54: #{_forward_impl.1} parent=0 // pred_check
    _
  $region55: #{_forward_impl.1} parent=0 // pred_check_branch
    %885 = sbr.rel (0) target = $region57
  $region56: #{_forward_impl.1} parent=0 // pred_region
    _
  $region57: #{_forward_impl.1} parent=0 // pred_fallthru
    _

</llo_original>
